<compile_context>
chip_gen: v6e
topology: v6e:2x2x1
jax: 0.10.0
libtpu: 0.0.40
codegen_flags: <defaults>
</compile_context>

<pallas_src>
import jax
import jax.numpy as jnp
from jax.experimental import pallas as pl
from jax.experimental.pallas import tpu as pltpu

HIDDEN = 256
LANE = 128
SUB_BF16 = 16          # bf16 packs 16 rows per sublane group
MAX_BLOCK_B = 512      # batch-tile cap (VMEM footprint stays < 4 MiB)


def _round_up(x, m):
    return (x + m - 1) // m * m


def _cdiv(a, b):
    return (a + b - 1) // b


# ---------------------------------------------------------------------------
# Kernel: three lane-dense matmuls; whole dueling head fused into the last one.
# ---------------------------------------------------------------------------
def dueling_dqn_kernel(x_ref, w1_ref, b1_ref, wh_ref, bh_ref, wq_ref, bq_ref,
                       q_ref):
    # x arrives unpadded in its feature dim; cast to bf16 in-kernel.
    x = x_ref[...].astype(jnp.bfloat16)                        # (TB, num_inputs)

    # feature = ReLU(x @ W1 + b1)                                (TB, 256)
    feat = jnp.dot(x, w1_ref[...], preferred_element_type=jnp.float32)
    feat = jnp.maximum(feat + b1_ref[...], 0.0).astype(jnp.bfloat16)

    # fused value||advantage hidden layer: one (256, 512) matmul (TB, 512)
    h = jnp.dot(feat, wh_ref[...], preferred_element_type=jnp.float32)
    h = jnp.maximum(h + bh_ref[...], 0.0).astype(jnp.bfloat16)

    # fused dueling head: block-diagonal [wv2_bcast ; wa2_centered] with the
    # mean-subtraction folded into weights/bias -> padded q directly.
    q = jnp.dot(h, wq_ref[...], preferred_element_type=jnp.float32) + bq_ref[...]
    q_ref[...] = q.astype(q_ref.dtype)                          # bf16 store


# ---------------------------------------------------------------------------
# Parameter init (PyTorch nn.Linear default init, transposed weight layout).
# ---------------------------------------------------------------------------
def init_params(key, num_inputs, num_actions, hidden=HIDDEN):
    ks = jax.random.split(key, 10)

    def linear(kw, kb, fan_in, fan_out):
        bound = 1.0 / jnp.sqrt(jnp.float32(fan_in))
        w = jax.random.uniform(kw, (fan_in, fan_out), jnp.float32, -bound, bound)
        b = jax.random.uniform(kb, (1, fan_out), jnp.float32, -bound, bound)
        return w, b

    w1, b1 = linear(ks[0], ks[1], num_inputs, hidden)
    wv1, bv1 = linear(ks[2], ks[3], hidden, hidden)
    wv2, bv2 = linear(ks[4], ks[5], hidden, 1)
    wa1, ba1 = linear(ks[6], ks[7], hidden, hidden)
    wa2, ba2 = linear(ks[8], ks[9], hidden, num_actions)
    return dict(w1=w1, b1=b1, wv1=wv1, bv1=bv1, wv2=wv2, bv2=bv2,
                wa1=wa1, ba1=ba1, wa2=wa2, ba2=ba2)


def fuse_params(p, num_inputs, num_actions, hidden=HIDDEN):
    """Fold the two streams + dueling combine into 3 lane-dense weight slabs."""
    out_pad = _round_up(num_actions, LANE)

    # Layer 1: keep the true (num_inputs, hidden) shape -- no K padding.
    w1 = p["w1"]

    # Fused hidden layer: [value | advantage].
    wh = jnp.concatenate([p["wv1"], p["wa1"]], axis=1)            # (256, 512)
    bh = jnp.concatenate([p["bv1"], p["ba1"]], axis=1)            # (1, 512)

    # Fused dueling head with the mean-subtraction folded in (centered in f32):
    #   q[:, j] = hv@wv2 + ha@(wa2[:,j] - mean_j wa2) + (bv2 + ba2[j] - mean ba2)
    wa2_c = p["wa2"] - jnp.mean(p["wa2"], axis=1, keepdims=True)
    ba2_c = p["ba2"] - jnp.mean(p["ba2"], axis=1, keepdims=True)
    wq = jnp.zeros((2 * hidden, out_pad), jnp.float32)
    wq = wq.at[:hidden, :num_actions].set(
        jnp.broadcast_to(p["wv2"], (hidden, num_actions)))
    wq = wq.at[hidden:, :num_actions].set(wa2_c)
    bq = jnp.zeros((1, out_pad), jnp.float32)
    bq = bq.at[:, :num_actions].set(p["bv2"] + ba2_c)

    # bf16 MXU operands; biases stay f32 (added post f32-accumulation).
    return dict(w1=w1.astype(jnp.bfloat16), b1=p["b1"],
                wh=wh.astype(jnp.bfloat16), bh=bh,
                wq=wq.astype(jnp.bfloat16), bq=bq)


# ---------------------------------------------------------------------------
# Batch tiling: bf16-friendly rows, adaptive tail, >=2 tiles for big batches.
# ---------------------------------------------------------------------------
def _choose_batch_tiling(B):
    bp = _round_up(max(B, SUB_BF16), SUB_BF16)
    n_tiles = _cdiv(bp, MAX_BLOCK_B)
    # v7x megacore: split mid/large batches across both TensorCores.
    if bp >= 256 and n_tiles < 2:
        n_tiles = 2
    block_b = _round_up(_cdiv(bp, n_tiles), SUB_BF16)
    n_tiles = _cdiv(bp, block_b)
    bp = n_tiles * block_b
    return bp, block_b, n_tiles


# ---------------------------------------------------------------------------
# Wrapper: (optionally) pad batch rows, tile batch over a parallel grid axis.
# ---------------------------------------------------------------------------
def dueling_dqn_forward(x, fp, num_actions):
    B, num_inputs = x.shape
    hidden = fp["w1"].shape[1]
    out_pad = fp["wq"].shape[1]

    bp, block_b, n_tiles = _choose_batch_tiling(B)

    # Only pad batch rows (tiny); skip the pad pass entirely when aligned.
    if bp == B:
        xp = x
    else:
        xp = jnp.zeros((bp, num_inputs), x.dtype).at[:B].set(x)

    def batch_spec(shape):
        return pl.BlockSpec(shape, lambda i: (i, 0))

    def weight_spec(shape):
        return pl.BlockSpec(shape, lambda i: (0, 0))    # VMEM-resident weights

    q_pad = pl.pallas_call(
        dueling_dqn_kernel,
        out_shape=jax.ShapeDtypeStruct((bp, out_pad), jnp.bfloat16),
        grid=(n_tiles,),
        in_specs=[
            batch_spec((block_b, num_inputs)),     # x (unpadded feature dim)
            weight_spec((num_inputs, hidden)),     # w1
            weight_spec((1, hidden)),              # b1
            weight_spec((hidden, 2 * hidden)),     # wh
            weight_spec((1, 2 * hidden)),          # bh
            weight_spec((2 * hidden, out_pad)),    # wq
            weight_spec((1, out_pad)),             # bq
        ],
        out_specs=batch_spec((block_b, out_pad)),
        compiler_params=pltpu.CompilerParams(
            dimension_semantics=("parallel",)),
    )(xp, fp["w1"], fp["b1"], fp["wh"], fp["bh"], fp["wq"], fp["bq"])

    # Slice away batch/lane padding; return f32 like the PyTorch module.
    return q_pad[:B, :num_actions].astype(jnp.float32)


# ---------------------------------------------------------------------------
# References.
# ---------------------------------------------------------------------------
def reference_forward(x, p):
    """Pure-JAX f32 reference of the PyTorch module's forward."""
    feat = jax.nn.relu(x @ p["w1"] + p["b1"])
    value = jax.nn.relu(feat @ p["wv1"] + p["bv1"]) @ p["wv2"] + p["bv2"]
    adv = jax.nn.relu(feat @ p["wa1"] + p["ba1"]) @ p["wa2"] + p["ba2"]
    return value + (adv - adv.mean(axis=1, keepdims=True))


def reference_forward_fused(x, fp, num_actions):
    """Mirrors the kernel math exactly (bf16 operands/output, f32 accumulate)."""
    xb = x.astype(jnp.bfloat16)
    feat = jnp.maximum(
        jnp.dot(xb, fp["w1"], preferred_element_type=jnp.float32) + fp["b1"],
        0.0).astype(jnp.bfloat16)
    h = jnp.maximum(
        jnp.dot(feat, fp["wh"], preferred_element_type=jnp.float32) + fp["bh"],
        0.0).astype(jnp.bfloat16)
    q = (jnp.dot(h, fp["wq"], preferred_element_type=jnp.float32)
         + fp["bq"]).astype(jnp.bfloat16)
    return q[:, :num_actions].astype(jnp.float32)


if __name__ == "__main__":
    # LunarLander-v2: observation dim 8, 4 discrete actions. Small batch.
    batch = 2
    num_inputs = 8
    num_actions = 4

    key = jax.random.PRNGKey(0)
    k_x, k_p = jax.random.split(key)

    x = jax.random.normal(k_x, (batch, num_inputs), dtype=jnp.float32)
    params = init_params(k_p, num_inputs, num_actions)
    fused = fuse_params(params, num_inputs, num_actions)

    q = jax.block_until_ready(dueling_dqn_forward(x, fused, num_actions))
    assert q.shape == (batch, num_actions)

    # (1) Kernel matches the fused bf16 math it implements.
    q_fused_ref = reference_forward_fused(x, fused, num_actions)
    assert jnp.allclose(q, q_fused_ref, atol=1e-2, rtol=1e-2), \
        "mismatch vs fused bf16 reference"

    # (2) Fusion/reparametrization preserves the module's f32 forward
    #     semantics to within bf16 weight/activation precision.
    q_f32_ref = reference_forward(x, params)
    assert jnp.allclose(q, q_f32_ref, atol=5e-2, rtol=5e-2), \
        "mismatch vs f32 module reference"

    # (3) Exercise the tiled / padded paths (unaligned batch, multi-tile batch).
    for big_b in (37, 300):
        xb = jax.random.normal(jax.random.PRNGKey(big_b), (big_b, num_inputs),
                               dtype=jnp.float32)
        qb = jax.block_until_ready(dueling_dqn_forward(xb, fused, num_actions))
        assert qb.shape == (big_b, num_actions)
        assert jnp.allclose(qb, reference_forward(xb, params),
                            atol=5e-2, rtol=5e-2), f"mismatch at B={big_b}"

    print("KERNEL_OK")
</pallas_src>

<mosaic_0001>
module attributes {stable_mosaic.version = 11 : i64} {
  func.func @dueling_dqn_kernel(%arg0: i32, %arg1: memref<16x8xf32, #tpu.memory_space<vmem>>, %arg2: memref<8x256xbf16, #tpu.memory_space<vmem>>, %arg3: memref<1x256xf32, #tpu.memory_space<vmem>>, %arg4: memref<256x512xbf16, #tpu.memory_space<vmem>>, %arg5: memref<1x512xf32, #tpu.memory_space<vmem>>, %arg6: memref<512x128xbf16, #tpu.memory_space<vmem>>, %arg7: memref<1x128xf32, #tpu.memory_space<vmem>>, %arg8: memref<16x128xbf16, #tpu.memory_space<vmem>>) attributes {dimension_semantics = [#tpu.dimension_semantics<parallel>], iteration_bounds = array<i64: 1>, scalar_prefetch = 0 : i64, scratch_operands = 0 : i64, tpu.core_type = #tpu.core_type<tc>, window_params = [{transform_indices = @transform_0, window_bounds = array<i64: 16, 8>}, {pipeline_mode = #tpu.pipeline_mode<synchronous>, transform_indices = @transform_1, window_bounds = array<i64: 8, 256>}, {pipeline_mode = #tpu.pipeline_mode<synchronous>, transform_indices = @transform_2, window_bounds = array<i64: 1, 256>}, {pipeline_mode = #tpu.pipeline_mode<synchronous>, transform_indices = @transform_3, window_bounds = array<i64: 256, 512>}, {pipeline_mode = #tpu.pipeline_mode<synchronous>, transform_indices = @transform_4, window_bounds = array<i64: 1, 512>}, {pipeline_mode = #tpu.pipeline_mode<synchronous>, transform_indices = @transform_5, window_bounds = array<i64: 512, 128>}, {pipeline_mode = #tpu.pipeline_mode<synchronous>, transform_indices = @transform_6, window_bounds = array<i64: 1, 128>}, {transform_indices = @transform_7, window_bounds = array<i64: 16, 128>}]} {
    %c0 = arith.constant 0 : index
    %c0_0 = arith.constant 0 : index
    %0 = vector.load %arg1[%c0, %c0_0] : memref<16x8xf32, #tpu.memory_space<vmem>>, vector<16x8xf32>
    %1 = arith.truncf %0 : vector<16x8xf32> to vector<16x8xbf16>
    %c0_1 = arith.constant 0 : index
    %c0_2 = arith.constant 0 : index
    %2 = vector.load %arg2[%c0_1, %c0_2] : memref<8x256xbf16, #tpu.memory_space<vmem>>, vector<8x256xbf16>
    %cst = arith.constant dense<0.000000e+00> : vector<16x256xf32>
    %3 = tpu.matmul %1, %2, %cst {dimension_numbers = #tpu.dot_dimension_numbers<[1], [0], [0], [1], [0, 0, 1, 1], [], []>} : vector<16x8xbf16>, vector<8x256xbf16>, vector<16x256xf32> -> vector<16x256xf32>
    %c0_3 = arith.constant 0 : index
    %c0_4 = arith.constant 0 : index
    %4 = vector.load %arg3[%c0_3, %c0_4] : memref<1x256xf32, #tpu.memory_space<vmem>>, vector<1x256xf32>
    %5 = vector.broadcast %4 : vector<1x256xf32> to vector<16x256xf32>
    %6 = arith.addf %3, %5 : vector<16x256xf32>
    %cst_5 = arith.constant 0.000000e+00 : f32
    %7 = vector.broadcast %cst_5 : f32 to vector<16x256xf32>
    %8 = arith.maximumf %6, %7 : vector<16x256xf32>
    %9 = arith.truncf %8 : vector<16x256xf32> to vector<16x256xbf16>
    %c0_6 = arith.constant 0 : index
    %c0_7 = arith.constant 0 : index
    %10 = vector.load %arg4[%c0_6, %c0_7] : memref<256x512xbf16, #tpu.memory_space<vmem>>, vector<256x512xbf16>
    %cst_8 = arith.constant dense<0.000000e+00> : vector<16x512xf32>
    %11 = tpu.matmul %9, %10, %cst_8 {dimension_numbers = #tpu.dot_dimension_numbers<[1], [0], [0], [1], [0, 0, 1, 1], [], []>} : vector<16x256xbf16>, vector<256x512xbf16>, vector<16x512xf32> -> vector<16x512xf32>
    %c0_9 = arith.constant 0 : index
    %c0_10 = arith.constant 0 : index
    %12 = vector.load %arg5[%c0_9, %c0_10] : memref<1x512xf32, #tpu.memory_space<vmem>>, vector<1x512xf32>
    %13 = vector.broadcast %12 : vector<1x512xf32> to vector<16x512xf32>
    %14 = arith.addf %11, %13 : vector<16x512xf32>
    %cst_11 = arith.constant 0.000000e+00 : f32
    %15 = vector.broadcast %cst_11 : f32 to vector<16x512xf32>
    %16 = arith.maximumf %14, %15 : vector<16x512xf32>
    %17 = arith.truncf %16 : vector<16x512xf32> to vector<16x512xbf16>
    %c0_12 = arith.constant 0 : index
    %c0_13 = arith.constant 0 : index
    %18 = vector.load %arg6[%c0_12, %c0_13] : memref<512x128xbf16, #tpu.memory_space<vmem>>, vector<512x128xbf16>
    %cst_14 = arith.constant dense<0.000000e+00> : vector<16x128xf32>
    %19 = tpu.matmul %17, %18, %cst_14 {dimension_numbers = #tpu.dot_dimension_numbers<[1], [0], [0], [1], [0, 0, 1, 1], [], []>} : vector<16x512xbf16>, vector<512x128xbf16>, vector<16x128xf32> -> vector<16x128xf32>
    %c0_15 = arith.constant 0 : index
    %c0_16 = arith.constant 0 : index
    %20 = vector.load %arg7[%c0_15, %c0_16] : memref<1x128xf32, #tpu.memory_space<vmem>>, vector<1x128xf32>
    %21 = vector.broadcast %20 : vector<1x128xf32> to vector<16x128xf32>
    %22 = arith.addf %19, %21 : vector<16x128xf32>
    %23 = arith.truncf %22 : vector<16x128xf32> to vector<16x128xbf16>
    %c0_17 = arith.constant 0 : index
    %c0_18 = arith.constant 0 : index
    %24 = vector.load %arg8[%c0_17, %c0_18] : memref<16x128xbf16, #tpu.memory_space<vmem>>, vector<16x128xbf16>
    tpu.vector_store %arg8[%c0_17, %c0_18], %23 {strides = array<i32>} : memref<16x128xbf16, #tpu.memory_space<vmem>>, vector<16x128xbf16>,
    return
  }
  func.func @transform_0(%arg0: i32) -> (i32, i32) {
    %c0_i32 = arith.constant 0 : i32
    %c0_i32_0 = arith.constant 0 : i32
    return %arg0, %c0_i32 : i32, i32
  }
  func.func @transform_1(%arg0: i32) -> (i32, i32) {
    %c0_i32 = arith.constant 0 : i32
    %c0_i32_0 = arith.constant 0 : i32
    %c0_i32_1 = arith.constant 0 : i32
    return %c0_i32, %c0_i32_0 : i32, i32
  }
  func.func @transform_2(%arg0: i32) -> (i32, i32) {
    %c0_i32 = arith.constant 0 : i32
    %c0_i32_0 = arith.constant 0 : i32
    %c0_i32_1 = arith.constant 0 : i32
    return %c0_i32, %c0_i32_0 : i32, i32
  }
  func.func @transform_3(%arg0: i32) -> (i32, i32) {
    %c0_i32 = arith.constant 0 : i32
    %c0_i32_0 = arith.constant 0 : i32
    %c0_i32_1 = arith.constant 0 : i32
    return %c0_i32, %c0_i32_0 : i32, i32
  }
  func.func @transform_4(%arg0: i32) -> (i32, i32) {
    %c0_i32 = arith.constant 0 : i32
    %c0_i32_0 = arith.constant 0 : i32
    %c0_i32_1 = arith.constant 0 : i32
    return %c0_i32, %c0_i32_0 : i32, i32
  }
  func.func @transform_5(%arg0: i32) -> (i32, i32) {
    %c0_i32 = arith.constant 0 : i32
    %c0_i32_0 = arith.constant 0 : i32
    %c0_i32_1 = arith.constant 0 : i32
    return %c0_i32, %c0_i32_0 : i32, i32
  }
  func.func @transform_6(%arg0: i32) -> (i32, i32) {
    %c0_i32 = arith.constant 0 : i32
    %c0_i32_0 = arith.constant 0 : i32
    %c0_i32_1 = arith.constant 0 : i32
    return %c0_i32, %c0_i32_0 : i32, i32
  }
  func.func @transform_7(%arg0: i32) -> (i32, i32) {
    %c0_i32 = arith.constant 0 : i32
    %c0_i32_0 = arith.constant 0 : i32
    return %arg0, %c0_i32 : i32, i32
  }
}

</mosaic_0001>

<llo_original>
// kernel: tpu_custom_call.1
$region0: #{tpu_custom_call.1}
  #allocation0 [shape = 'u32[]', space=smem, size = 0x4, offset = 0x4, fixed_abs, tag = 'smem constant byte address 0x4 - core index']
  #allocation1 [shape = 'u32[144,128]{1,0:T(1,128)}', space=vmem, size = 0x12000, scoped, tag = 'internal scratch']
  %s0 = inlined_call_operand.vmem [shape: f32[16,8], index: 0, kind: input, shape index: {}]
  %s1 = inlined_call_operand.vmem [shape: bf16[8,256], index: 1, kind: input, shape index: {}]
  %s2 = inlined_call_operand.vmem [shape: f32[1,256], index: 2, kind: input, shape index: {}]
  %s3 = inlined_call_operand.hbm [shape: bf16[256,512], index: 3, kind: input, shape index: {}]
  %s4 = inlined_call_operand.vmem [shape: f32[1,512], index: 4, kind: input, shape index: {}]
  %s5 = inlined_call_operand.hbm [shape: bf16[512,128], index: 5, kind: input, shape index: {}]
  %s6 = inlined_call_operand.vmem [shape: f32[1,128], index: 6, kind: input, shape index: {}]
  %s7 = inlined_call_operand.hbm [shape: bf16[16,128], index: 7, kind: output, shape index: {}]
  %s8 = sld [smem:[#allocation0]]
  $region46: #{tpu_custom_call.1} parent=0
    _
  %s10 = ssub.s32 1, %s8
  %s11 = scalar_select 0, %s10, %s8
  $region1: #{tpu_custom_call.1} parent=0
    #allocation2 [shape = 'u8[262144]{0}', space=vmem, size = 0x40000, scoped, tag = 'input window, operand 3, single buffered']
    #allocation3 [shape = 's32[1]{0}', space=sflag, size = 0x4, scoped, tag = 'scoped memory for tpu_custom_call.1']
    #allocation4 [shape = 's32[1]{0}', space=sflag, size = 0x4, scoped, tag = 'scoped memory for tpu_custom_call.1']
    #allocation5 [shape = 'u8[131072]{0}', space=vmem, size = 0x20000, scoped, tag = 'input window, operand 5, single buffered']
    #allocation6 [shape = 's32[1]{0}', space=sflag, size = 0x4, scoped, tag = 'scoped memory for tpu_custom_call.1']
    #allocation7 [shape = 'u8[4096]{0}', space=vmem, size = 0x1000, scoped, tag = 'output window, operand 0, single buffered']
    %12 = vsyncpa [#allocation3], 0
    %13 = vsyncpa [#allocation6], 0
    %14 = vsyncpa [#allocation4], 0
    // Predicated region
    $region2: #{tpu_custom_call.1} parent=1 // pred_check
      _
    $region3: #{tpu_custom_call.1} parent=1 // pred_check_branch
      %16 = sbr.rel (0) target = $region5
    $region4: #{tpu_custom_call.1} parent=1 // pred_region
      _
    $region5: #{tpu_custom_call.1} parent=1 // pred_fallthru
      _
    // Predicated region
    $region6: #{tpu_custom_call.1} parent=1 // pred_check
      _
    $region7: #{tpu_custom_call.1} parent=1 // pred_check_branch
      %18 = sbr.rel (0) target = $region9
    $region8: #{tpu_custom_call.1} parent=1 // pred_region
      _
    $region9: #{tpu_custom_call.1} parent=1 // pred_fallthru
      _
    // Predicated region
    $region10: #{tpu_custom_call.1} parent=1 // pred_check
      _
    $region11: #{tpu_custom_call.1} parent=1 // pred_check_branch
      %20 = sbr.rel (0) target = $region13
    $region12: #{tpu_custom_call.1} parent=1 // pred_region
      _
    $region13: #{tpu_custom_call.1} parent=1 // pred_fallthru
      _
    // Predicated region
    $region14: #{tpu_custom_call.1} parent=1 // pred_check
      _
    $region15: #{tpu_custom_call.1} parent=1 // pred_check_branch
      %22 = sbr.rel (0) target = $region17
    $region16: #{tpu_custom_call.1} parent=1 // pred_region
      %s24 = ssub.s32 8192, 8192
      %25 = vsyncadd [#allocation3], %s24
      %s26 = sshll.u32 [#allocation2], 4
      %s27 = int_to_ptr.vmem [resolvable:$true] %s26
      %32 = dma.hbm_to_vmem [thread:$0]  %s3, 8192, %s27, [#allocation3], 256, 256, 16
    $region17: #{tpu_custom_call.1} parent=1 // pred_fallthru
      _
    // Predicated region
    $region18: #{tpu_custom_call.1} parent=1 // pred_check
      _
    $region19: #{tpu_custom_call.1} parent=1 // pred_check_branch
      %34 = sbr.rel (0) target = $region21
    $region20: #{tpu_custom_call.1} parent=1 // pred_region
      _
    $region21: #{tpu_custom_call.1} parent=1 // pred_fallthru
      _
    // Predicated region
    $region22: #{tpu_custom_call.1} parent=1 // pred_check
      _
    $region23: #{tpu_custom_call.1} parent=1 // pred_check_branch
      %36 = sbr.rel (0) target = $region25
    $region24: #{tpu_custom_call.1} parent=1 // pred_region
      %s38 = ssub.s32 4096, 4096
      %39 = vsyncadd [#allocation6], %s38
      %s40 = sshll.u32 [#allocation5], 4
      %s41 = int_to_ptr.vmem [resolvable:$true] %s40
      %46 = dma.hbm_to_vmem [thread:$0]  %s5, 4096, %s41, [#allocation6], 64, 64, 4
    $region25: #{tpu_custom_call.1} parent=1 // pred_fallthru
      _
    // Predicated region
    $region26: #{tpu_custom_call.1} parent=1 // pred_check
      _
    $region27: #{tpu_custom_call.1} parent=1 // pred_check_branch
      %48 = sbr.rel (0) target = $region29
    $region28: #{tpu_custom_call.1} parent=1 // pred_region
      _
    $region29: #{tpu_custom_call.1} parent=1 // pred_fallthru
      _
    // Predicated region
    $region30: #{tpu_custom_call.1} parent=1 // pred_check
      _
    $region31: #{tpu_custom_call.1} parent=1 // pred_check_branch
      %50 = sbr.rel (0) target = $region33
    $region32: #{tpu_custom_call.1} parent=1 // pred_region
      %51 = dma.done [#allocation3], 8192
    $region33: #{tpu_custom_call.1} parent=1 // pred_fallthru
      _
    // Predicated region
    $region34: #{tpu_custom_call.1} parent=1 // pred_check
      _
    $region35: #{tpu_custom_call.1} parent=1 // pred_check_branch
      %53 = sbr.rel (0) target = $region37
    $region36: #{tpu_custom_call.1} parent=1 // pred_region
      %54 = dma.done [#allocation6], 4096
    $region37: #{tpu_custom_call.1} parent=1 // pred_fallthru
      _
    %v56 = vld [vmem:[%s0] sm:$0xff]
    %v57 = vld [vmem:[%s0 + $0x8] sm:$0xff]
    %v58 = vpack.c.bf16 %v57, %v56
    %v59 = vld [vmem:[%s1] sm:$0xff]
    %v60 = vld [vmem:[%s2] sm:$0x3]
    %v62 = vlaneseq
    %v63 = vshrl.u32 %v62, 7
    %v64 = vsub.s32 0, %v63
    %v65 = vrot.slane %v60, %v64
    %v66 = vlaneseq
    %v67 = vshrl.u32 %v66, 7
    %v68 = vsub.s32 1, %v67
    %v69 = vrot.slane %v60, %v68
    %v73 = vunpack.c.l.b16 %v59
    %v74 = vunpack.c.h.b16 %v59
    %v75 = vpack.c.b16 %v73, %v73
    %v76 = vpack.c.b16 %v74, %v74
    %vm77 = vcmask 64512
    %v79 = vsel %vm77, %v58, 0
    %vm81 = vcmask 1043456
    %v83 = vsel %vm81, %v75, 0
    %v86 = vsel %vm81, %v76, 0
    %88 = vmatprep.subr.bf16.mxu0 0
    %89 = vmatpush1.bf16.msra.mxu0 0
    %90 = vmatprep.subr.bf16.mxu0 0
    %91 = vmatpush1.bf16.msra.mxu0 0
    %92 = vmatprep.subr.bf16.mxu0 0
    %93 = vmatpush1.bf16.msra.mxu0 0
    %94 = vmatprep.subr.bf16.mxu0 0
    %95 = vmatpush1.bf16.msra.mxu0 0
    %96 = vmatprep.subr.bf16.mxu0 0
    %97 = vmatpush1.bf16.msra.mxu0 0
    %98 = vmatprep.subr.bf16.mxu0 0
    %99 = vmatpush1.bf16.msra.mxu0 0
    %100 = vmatprep.subr.bf16.mxu0 0
    %101 = vmatpush1.bf16.msra.mxu0 0
    %102 = vmatprep.subr.bf16.mxu0 %v86
    %103 = vmatpush1.bf16.msra.mxu0 %v83
    %104 = vmatprep.subr.bf16.mxu0 0
    %105 = vmatpush2.bf16.msra.mxu0 0
    %106 = vmatprep.subr.bf16.mxu0 0
    %107 = vmatpush2.bf16.msra.mxu0 0
    %108 = vmatprep.subr.bf16.mxu0 0
    %109 = vmatpush2.bf16.msra.mxu0 0
    %110 = vmatprep.subr.bf16.mxu0 0
    %111 = vmatpush2.bf16.msra.mxu0 0
    %112 = vmatprep.subr.bf16.mxu0 0
    %113 = vmatpush2.bf16.msra.mxu0 0
    %114 = vmatprep.subr.bf16.mxu0 0
    %115 = vmatpush2.bf16.msra.mxu0 0
    %116 = vmatprep.subr.bf16.mxu0 0
    %117 = vmatpush2.bf16.msra.mxu0 0
    %118 = vmatprep.subr.bf16.mxu0 0
    %119 = vmatpush2.bf16.msra.mxu0 0
    %120 = vmatprep.mubr.bf16.mxu0 0
    %121 = vmatmul.mubr.bf16.gmra.mxu0 %v79
    %v122 = vpop.f32.mrf.mxu0
    %v123 = vadd.f32 %v65, %v122
    %v124 = vpop.f32.mrf.mxu0
    %v125 = vadd.f32 %v69, %v124
    %v126 = vpop.f32.mrf.mxu0
    %v127 = vadd.f32 %v65, %v126
    %v128 = vpop.f32.mrf.mxu0
    %v129 = vadd.f32 %v69, %v128
    %130 = vdwg.mxu0
    %v131 = vmax.f32 %v123, 0.0
    %v132 = vmax.f32 %v125, 0.0
    %v133 = vmax.f32 %v127, 0.0
    %v134 = vmax.f32 %v129, 0.0
    %v135 = vpack.c.bf16 %v133, %v131
    %v136 = vpack.c.bf16 %v134, %v132
    %v137 = vld [vmem:[#allocation2] sm:$0xff]
    %v138 = vld [vmem:[#allocation2 + $0x8] sm:$0xff]
    %v139 = vld [vmem:[#allocation2 + $0x10] sm:$0xff]
    %v140 = vld [vmem:[#allocation2 + $0x18] sm:$0xff]
    %v141 = vld [vmem:[#allocation2 + $0x20] sm:$0xff]
    %v142 = vld [vmem:[#allocation2 + $0x28] sm:$0xff]
    %v143 = vld [vmem:[#allocation2 + $0x30] sm:$0xff]
    %v144 = vld [vmem:[#allocation2 + $0x38] sm:$0xff]
    %v145 = vld [vmem:[#allocation2 + $0x40] sm:$0xff]
    %v146 = vld [vmem:[#allocation2 + $0x48] sm:$0xff]
    %v147 = vld [vmem:[#allocation2 + $0x50] sm:$0xff]
    %v148 = vld [vmem:[#allocation2 + $0x58] sm:$0xff]
    %v149 = vld [vmem:[#allocation2 + $0x60] sm:$0xff]
    %v150 = vld [vmem:[#allocation2 + $0x68] sm:$0xff]
    %v151 = vld [vmem:[#allocation2 + $0x70] sm:$0xff]
    %v152 = vld [vmem:[#allocation2 + $0x78] sm:$0xff]
    %v153 = vld [vmem:[#allocation2 + $0x80] sm:$0xff]
    %v154 = vld [vmem:[#allocation2 + $0x88] sm:$0xff]
    %v155 = vld [vmem:[#allocation2 + $0x90] sm:$0xff]
    %v156 = vld [vmem:[#allocation2 + $0x98] sm:$0xff]
    %v157 = vld [vmem:[#allocation2 + $0xa0] sm:$0xff]
    %v158 = vld [vmem:[#allocation2 + $0xa8] sm:$0xff]
    %v159 = vld [vmem:[#allocation2 + $0xb0] sm:$0xff]
    %v160 = vld [vmem:[#allocation2 + $0xb8] sm:$0xff]
    %v161 = vld [vmem:[#allocation2 + $0xc0] sm:$0xff]
    %v162 = vld [vmem:[#allocation2 + $0xc8] sm:$0xff]
    %v163 = vld [vmem:[#allocation2 + $0xd0] sm:$0xff]
    %v164 = vld [vmem:[#allocation2 + $0xd8] sm:$0xff]
    %v165 = vld [vmem:[#allocation2 + $0xe0] sm:$0xff]
    %v166 = vld [vmem:[#allocation2 + $0xe8] sm:$0xff]
    %v167 = vld [vmem:[#allocation2 + $0xf0] sm:$0xff]
    %v168 = vld [vmem:[#allocation2 + $0xf8] sm:$0xff]
    %v169 = vld [vmem:[#allocation2 + $0x100] sm:$0xff]
    %v170 = vld [vmem:[#allocation2 + $0x108] sm:$0xff]
    %v171 = vld [vmem:[#allocation2 + $0x110] sm:$0xff]
    %v172 = vld [vmem:[#allocation2 + $0x118] sm:$0xff]
    %v173 = vld [vmem:[#allocation2 + $0x120] sm:$0xff]
    %v174 = vld [vmem:[#allocation2 + $0x128] sm:$0xff]
    %v175 = vld [vmem:[#allocation2 + $0x130] sm:$0xff]
    %v176 = vld [vmem:[#allocation2 + $0x138] sm:$0xff]
    %v177 = vld [vmem:[#allocation2 + $0x140] sm:$0xff]
    %v178 = vld [vmem:[#allocation2 + $0x148] sm:$0xff]
    %v179 = vld [vmem:[#allocation2 + $0x150] sm:$0xff]
    %v180 = vld [vmem:[#allocation2 + $0x158] sm:$0xff]
    %v181 = vld [vmem:[#allocation2 + $0x160] sm:$0xff]
    %v182 = vld [vmem:[#allocation2 + $0x168] sm:$0xff]
    %v183 = vld [vmem:[#allocation2 + $0x170] sm:$0xff]
    %v184 = vld [vmem:[#allocation2 + $0x178] sm:$0xff]
    %v185 = vld [vmem:[#allocation2 + $0x180] sm:$0xff]
    %v186 = vld [vmem:[#allocation2 + $0x188] sm:$0xff]
    %v187 = vld [vmem:[#allocation2 + $0x190] sm:$0xff]
    %v188 = vld [vmem:[#allocation2 + $0x198] sm:$0xff]
    %v189 = vld [vmem:[#allocation2 + $0x1a0] sm:$0xff]
    %v190 = vld [vmem:[#allocation2 + $0x1a8] sm:$0xff]
    %v191 = vld [vmem:[#allocation2 + $0x1b0] sm:$0xff]
    %v192 = vld [vmem:[#allocation2 + $0x1b8] sm:$0xff]
    %v193 = vld [vmem:[#allocation2 + $0x1c0] sm:$0xff]
    %v194 = vld [vmem:[#allocation2 + $0x1c8] sm:$0xff]
    %v195 = vld [vmem:[#allocation2 + $0x1d0] sm:$0xff]
    %v196 = vld [vmem:[#allocation2 + $0x1d8] sm:$0xff]
    %v197 = vld [vmem:[#allocation2 + $0x1e0] sm:$0xff]
    %v198 = vld [vmem:[#allocation2 + $0x1e8] sm:$0xff]
    %v199 = vld [vmem:[#allocation2 + $0x1f0] sm:$0xff]
    %v200 = vld [vmem:[#allocation2 + $0x1f8] sm:$0xff]
    %v201 = vld [vmem:[%s4] sm:$0xf]
    %v203 = vlaneseq
    %v204 = vshrl.u32 %v203, 7
    %v205 = vsub.s32 0, %v204
    %v206 = vrot.slane %v201, %v205
    %v207 = vlaneseq
    %v208 = vshrl.u32 %v207, 7
    %v209 = vsub.s32 1, %v208
    %v210 = vrot.slane %v201, %v209
    %v211 = vlaneseq
    %v212 = vshrl.u32 %v211, 7
    %v213 = vsub.s32 2, %v212
    %v214 = vrot.slane %v201, %v213
    %v215 = vlaneseq
    %v216 = vshrl.u32 %v215, 7
    %v217 = vsub.s32 3, %v216
    %v218 = vrot.slane %v201, %v217
    %v287 = vunpack.c.l.b16 %v137
    %v288 = vunpack.c.h.b16 %v137
    %v289 = vunpack.c.l.b16 %v138
    %v290 = vunpack.c.h.b16 %v138
    %v291 = vunpack.c.l.b16 %v139
    %v292 = vunpack.c.h.b16 %v139
    %v293 = vunpack.c.l.b16 %v140
    %v294 = vunpack.c.h.b16 %v140
    %v295 = vunpack.c.l.b16 %v141
    %v296 = vunpack.c.h.b16 %v141
    %v297 = vunpack.c.l.b16 %v142
    %v298 = vunpack.c.h.b16 %v142
    %v299 = vunpack.c.l.b16 %v143
    %v300 = vunpack.c.h.b16 %v143
    %v301 = vunpack.c.l.b16 %v144
    %v302 = vunpack.c.h.b16 %v144
    %v303 = vunpack.c.l.b16 %v145
    %v304 = vunpack.c.h.b16 %v145
    %v305 = vunpack.c.l.b16 %v146
    %v306 = vunpack.c.h.b16 %v146
    %v307 = vunpack.c.l.b16 %v147
    %v308 = vunpack.c.h.b16 %v147
    %v309 = vunpack.c.l.b16 %v148
    %v310 = vunpack.c.h.b16 %v148
    %v311 = vunpack.c.l.b16 %v149
    %v312 = vunpack.c.h.b16 %v149
    %v313 = vunpack.c.l.b16 %v150
    %v314 = vunpack.c.h.b16 %v150
    %v315 = vunpack.c.l.b16 %v151
    %v316 = vunpack.c.h.b16 %v151
    %v317 = vunpack.c.l.b16 %v152
    %v318 = vunpack.c.h.b16 %v152
    %v319 = vunpack.c.l.b16 %v153
    %v320 = vunpack.c.h.b16 %v153
    %v321 = vunpack.c.l.b16 %v154
    %v322 = vunpack.c.h.b16 %v154
    %v323 = vunpack.c.l.b16 %v155
    %v324 = vunpack.c.h.b16 %v155
    %v325 = vunpack.c.l.b16 %v156
    %v326 = vunpack.c.h.b16 %v156
    %v327 = vunpack.c.l.b16 %v157
    %v328 = vunpack.c.h.b16 %v157
    %v329 = vunpack.c.l.b16 %v158
    %v330 = vunpack.c.h.b16 %v158
    %v331 = vunpack.c.l.b16 %v159
    %v332 = vunpack.c.h.b16 %v159
    %v333 = vunpack.c.l.b16 %v160
    %v334 = vunpack.c.h.b16 %v160
    %v335 = vunpack.c.l.b16 %v161
    %v336 = vunpack.c.h.b16 %v161
    %v337 = vunpack.c.l.b16 %v162
    %v338 = vunpack.c.h.b16 %v162
    %v339 = vunpack.c.l.b16 %v163
    %v340 = vunpack.c.h.b16 %v163
    %v341 = vunpack.c.l.b16 %v164
    %v342 = vunpack.c.h.b16 %v164
    %v343 = vunpack.c.l.b16 %v165
    %v344 = vunpack.c.h.b16 %v165
    %v345 = vunpack.c.l.b16 %v166
    %v346 = vunpack.c.h.b16 %v166
    %v347 = vunpack.c.l.b16 %v167
    %v348 = vunpack.c.h.b16 %v167
    %v349 = vunpack.c.l.b16 %v168
    %v350 = vunpack.c.h.b16 %v168
    %v351 = vunpack.c.l.b16 %v169
    %v352 = vunpack.c.h.b16 %v169
    %v353 = vunpack.c.l.b16 %v170
    %v354 = vunpack.c.h.b16 %v170
    %v355 = vunpack.c.l.b16 %v171
    %v356 = vunpack.c.h.b16 %v171
    %v357 = vunpack.c.l.b16 %v172
    %v358 = vunpack.c.h.b16 %v172
    %v359 = vunpack.c.l.b16 %v173
    %v360 = vunpack.c.h.b16 %v173
    %v361 = vunpack.c.l.b16 %v174
    %v362 = vunpack.c.h.b16 %v174
    %v363 = vunpack.c.l.b16 %v175
    %v364 = vunpack.c.h.b16 %v175
    %v365 = vunpack.c.l.b16 %v176
    %v366 = vunpack.c.h.b16 %v176
    %v367 = vunpack.c.l.b16 %v177
    %v368 = vunpack.c.h.b16 %v177
    %v369 = vunpack.c.l.b16 %v178
    %v370 = vunpack.c.h.b16 %v178
    %v371 = vunpack.c.l.b16 %v179
    %v372 = vunpack.c.h.b16 %v179
    %v373 = vunpack.c.l.b16 %v180
    %v374 = vunpack.c.h.b16 %v180
    %v375 = vunpack.c.l.b16 %v181
    %v376 = vunpack.c.h.b16 %v181
    %v377 = vunpack.c.l.b16 %v182
    %v378 = vunpack.c.h.b16 %v182
    %v379 = vunpack.c.l.b16 %v183
    %v380 = vunpack.c.h.b16 %v183
    %v381 = vunpack.c.l.b16 %v184
    %v382 = vunpack.c.h.b16 %v184
    %v383 = vunpack.c.l.b16 %v185
    %v384 = vunpack.c.h.b16 %v185
    %v385 = vunpack.c.l.b16 %v186
    %v386 = vunpack.c.h.b16 %v186
    %v387 = vunpack.c.l.b16 %v187
    %v388 = vunpack.c.h.b16 %v187
    %v389 = vunpack.c.l.b16 %v188
    %v390 = vunpack.c.h.b16 %v188
    %v391 = vunpack.c.l.b16 %v189
    %v392 = vunpack.c.h.b16 %v189
    %v393 = vunpack.c.l.b16 %v190
    %v394 = vunpack.c.h.b16 %v190
    %v395 = vunpack.c.l.b16 %v191
    %v396 = vunpack.c.h.b16 %v191
    %v397 = vunpack.c.l.b16 %v192
    %v398 = vunpack.c.h.b16 %v192
    %v399 = vunpack.c.l.b16 %v193
    %v400 = vunpack.c.h.b16 %v193
    %v401 = vunpack.c.l.b16 %v194
    %v402 = vunpack.c.h.b16 %v194
    %v403 = vunpack.c.l.b16 %v195
    %v404 = vunpack.c.h.b16 %v195
    %v405 = vunpack.c.l.b16 %v196
    %v406 = vunpack.c.h.b16 %v196
    %v407 = vunpack.c.l.b16 %v197
    %v408 = vunpack.c.h.b16 %v197
    %v409 = vunpack.c.l.b16 %v198
    %v410 = vunpack.c.h.b16 %v198
    %v411 = vunpack.c.l.b16 %v199
    %v412 = vunpack.c.h.b16 %v199
    %v413 = vunpack.c.l.b16 %v200
    %v414 = vunpack.c.h.b16 %v200
    %v415 = vpack.c.b16 %v291, %v287
    %v416 = vpack.c.b16 %v292, %v288
    %v417 = vpack.c.b16 %v293, %v289
    %v418 = vpack.c.b16 %v294, %v290
    %v419 = vpack.c.b16 %v299, %v295
    %v420 = vpack.c.b16 %v300, %v296
    %v421 = vpack.c.b16 %v301, %v297
    %v422 = vpack.c.b16 %v302, %v298
    %v423 = vpack.c.b16 %v307, %v303
    %v424 = vpack.c.b16 %v308, %v304
    %v425 = vpack.c.b16 %v309, %v305
    %v426 = vpack.c.b16 %v310, %v306
    %v427 = vpack.c.b16 %v315, %v311
    %v428 = vpack.c.b16 %v316, %v312
    %v429 = vpack.c.b16 %v317, %v313
    %v430 = vpack.c.b16 %v318, %v314
    %v431 = vpack.c.b16 %v323, %v319
    %v432 = vpack.c.b16 %v324, %v320
    %v433 = vpack.c.b16 %v325, %v321
    %v434 = vpack.c.b16 %v326, %v322
    %v435 = vpack.c.b16 %v331, %v327
    %v436 = vpack.c.b16 %v332, %v328
    %v437 = vpack.c.b16 %v333, %v329
    %v438 = vpack.c.b16 %v334, %v330
    %v439 = vpack.c.b16 %v339, %v335
    %v440 = vpack.c.b16 %v340, %v336
    %v441 = vpack.c.b16 %v341, %v337
    %v442 = vpack.c.b16 %v342, %v338
    %v443 = vpack.c.b16 %v347, %v343
    %v444 = vpack.c.b16 %v348, %v344
    %v445 = vpack.c.b16 %v349, %v345
    %v446 = vpack.c.b16 %v350, %v346
    %v447 = vpack.c.b16 %v355, %v351
    %v448 = vpack.c.b16 %v356, %v352
    %v449 = vpack.c.b16 %v357, %v353
    %v450 = vpack.c.b16 %v358, %v354
    %v451 = vpack.c.b16 %v363, %v359
    %v452 = vpack.c.b16 %v364, %v360
    %v453 = vpack.c.b16 %v365, %v361
    %v454 = vpack.c.b16 %v366, %v362
    %v455 = vpack.c.b16 %v371, %v367
    %v456 = vpack.c.b16 %v372, %v368
    %v457 = vpack.c.b16 %v373, %v369
    %v458 = vpack.c.b16 %v374, %v370
    %v459 = vpack.c.b16 %v379, %v375
    %v460 = vpack.c.b16 %v380, %v376
    %v461 = vpack.c.b16 %v381, %v377
    %v462 = vpack.c.b16 %v382, %v378
    %v463 = vpack.c.b16 %v387, %v383
    %v464 = vpack.c.b16 %v388, %v384
    %v465 = vpack.c.b16 %v389, %v385
    %v466 = vpack.c.b16 %v390, %v386
    %v467 = vpack.c.b16 %v395, %v391
    %v468 = vpack.c.b16 %v396, %v392
    %v469 = vpack.c.b16 %v397, %v393
    %v470 = vpack.c.b16 %v398, %v394
    %v471 = vpack.c.b16 %v403, %v399
    %v472 = vpack.c.b16 %v404, %v400
    %v473 = vpack.c.b16 %v405, %v401
    %v474 = vpack.c.b16 %v406, %v402
    %v475 = vpack.c.b16 %v411, %v407
    %v476 = vpack.c.b16 %v412, %v408
    %v477 = vpack.c.b16 %v413, %v409
    %v478 = vpack.c.b16 %v414, %v410
    %543 = vmatprep.subr.bf16.mxu0 %v444
    %544 = vmatpush1.bf16.msra.mxu0 %v443
    %545 = vmatprep.subr.bf16.mxu0 %v440
    %546 = vmatpush1.bf16.msra.mxu0 %v439
    %547 = vmatprep.subr.bf16.mxu0 %v436
    %548 = vmatpush1.bf16.msra.mxu0 %v435
    %549 = vmatprep.subr.bf16.mxu0 %v432
    %550 = vmatpush1.bf16.msra.mxu0 %v431
    %551 = vmatprep.subr.bf16.mxu0 %v428
    %552 = vmatpush1.bf16.msra.mxu0 %v427
    %553 = vmatprep.subr.bf16.mxu0 %v424
    %554 = vmatpush1.bf16.msra.mxu0 %v423
    %555 = vmatprep.subr.bf16.mxu0 %v420
    %556 = vmatpush1.bf16.msra.mxu0 %v419
    %557 = vmatprep.subr.bf16.mxu0 %v416
    %558 = vmatpush1.bf16.msra.mxu0 %v415
    %559 = vmatprep.subr.bf16.mxu0 %v476
    %560 = vmatpush2.bf16.msra.mxu0 %v475
    %561 = vmatprep.subr.bf16.mxu0 %v472
    %562 = vmatpush2.bf16.msra.mxu0 %v471
    %563 = vmatprep.subr.bf16.mxu0 %v468
    %564 = vmatpush2.bf16.msra.mxu0 %v467
    %565 = vmatprep.subr.bf16.mxu0 %v464
    %566 = vmatpush2.bf16.msra.mxu0 %v463
    %567 = vmatprep.subr.bf16.mxu0 %v460
    %568 = vmatpush2.bf16.msra.mxu0 %v459
    %569 = vmatprep.subr.bf16.mxu0 %v456
    %570 = vmatpush2.bf16.msra.mxu0 %v455
    %571 = vmatprep.subr.bf16.mxu0 %v452
    %572 = vmatpush2.bf16.msra.mxu0 %v451
    %573 = vmatprep.subr.bf16.mxu0 %v448
    %574 = vmatpush2.bf16.msra.mxu0 %v447
    %575 = vmatprep.mubr.bf16.mxu0 %v136
    %576 = vmatmul.mubr.bf16.gmra.mxu0 %v135
    %v577 = vpop.f32.mrf.mxu0
    %v578 = vadd.f32 %v206, %v577
    %v579 = vpop.f32.mrf.mxu0
    %v580 = vadd.f32 %v210, %v579
    %v581 = vpop.f32.mrf.mxu0
    %v582 = vadd.f32 %v206, %v581
    %v583 = vpop.f32.mrf.mxu0
    %v584 = vadd.f32 %v210, %v583
    %585 = vdwg.mxu0
    %586 = vmatprep.subr.bf16.mxu0 %v446
    %587 = vmatpush1.bf16.msra.mxu0 %v445
    %588 = vmatprep.subr.bf16.mxu0 %v442
    %589 = vmatpush1.bf16.msra.mxu0 %v441
    %590 = vmatprep.subr.bf16.mxu0 %v438
    %591 = vmatpush1.bf16.msra.mxu0 %v437
    %592 = vmatprep.subr.bf16.mxu0 %v434
    %593 = vmatpush1.bf16.msra.mxu0 %v433
    %594 = vmatprep.subr.bf16.mxu0 %v430
    %595 = vmatpush1.bf16.msra.mxu0 %v429
    %596 = vmatprep.subr.bf16.mxu0 %v426
    %597 = vmatpush1.bf16.msra.mxu0 %v425
    %598 = vmatprep.subr.bf16.mxu0 %v422
    %599 = vmatpush1.bf16.msra.mxu0 %v421
    %600 = vmatprep.subr.bf16.mxu0 %v418
    %601 = vmatpush1.bf16.msra.mxu0 %v417
    %602 = vmatprep.subr.bf16.mxu0 %v478
    %603 = vmatpush2.bf16.msra.mxu0 %v477
    %604 = vmatprep.subr.bf16.mxu0 %v474
    %605 = vmatpush2.bf16.msra.mxu0 %v473
    %606 = vmatprep.subr.bf16.mxu0 %v470
    %607 = vmatpush2.bf16.msra.mxu0 %v469
    %608 = vmatprep.subr.bf16.mxu0 %v466
    %609 = vmatpush2.bf16.msra.mxu0 %v465
    %610 = vmatprep.subr.bf16.mxu0 %v462
    %611 = vmatpush2.bf16.msra.mxu0 %v461
    %612 = vmatprep.subr.bf16.mxu0 %v458
    %613 = vmatpush2.bf16.msra.mxu0 %v457
    %614 = vmatprep.subr.bf16.mxu0 %v454
    %615 = vmatpush2.bf16.msra.mxu0 %v453
    %616 = vmatprep.subr.bf16.mxu0 %v450
    %617 = vmatpush2.bf16.msra.mxu0 %v449
    %618 = vmatprep.mubr.bf16.mxu0 %v136
    %619 = vmatmul.mubr.bf16.gmra.mxu0 %v135
    %v620 = vpop.f32.mrf.mxu0
    %v621 = vadd.f32 %v214, %v620
    %v622 = vpop.f32.mrf.mxu0
    %v623 = vadd.f32 %v218, %v622
    %v624 = vpop.f32.mrf.mxu0
    %v625 = vadd.f32 %v214, %v624
    %v626 = vpop.f32.mrf.mxu0
    %v627 = vadd.f32 %v218, %v626
    %628 = vdwg.mxu0
    %v629 = vmax.f32 %v578, 0.0
    %v630 = vmax.f32 %v580, 0.0
    %v631 = vmax.f32 %v621, 0.0
    %v632 = vmax.f32 %v623, 0.0
    %v633 = vmax.f32 %v582, 0.0
    %v634 = vmax.f32 %v584, 0.0
    %v635 = vmax.f32 %v625, 0.0
    %v636 = vmax.f32 %v627, 0.0
    %v637 = vpack.c.bf16 %v633, %v629
    %v638 = vpack.c.bf16 %v634, %v630
    %v639 = vpack.c.bf16 %v635, %v631
    %v640 = vpack.c.bf16 %v636, %v632
    %v641 = vld [vmem:[#allocation5] sm:$0xf]
    %v642 = vld [vmem:[#allocation5 + $0x4] sm:$0xf]
    %v643 = vld [vmem:[#allocation5 + $0x8] sm:$0xf]
    %v644 = vld [vmem:[#allocation5 + $0xc] sm:$0xf]
    %v645 = vld [vmem:[#allocation5 + $0x10] sm:$0xf]
    %v646 = vld [vmem:[#allocation5 + $0x14] sm:$0xf]
    %v647 = vld [vmem:[#allocation5 + $0x18] sm:$0xf]
    %v648 = vld [vmem:[#allocation5 + $0x1c] sm:$0xf]
    %v649 = vld [vmem:[#allocation5 + $0x20] sm:$0xf]
    %v650 = vld [vmem:[#allocation5 + $0x24] sm:$0xf]
    %v651 = vld [vmem:[#allocation5 + $0x28] sm:$0xf]
    %v652 = vld [vmem:[#allocation5 + $0x2c] sm:$0xf]
    %v653 = vld [vmem:[#allocation5 + $0x30] sm:$0xf]
    %v654 = vld [vmem:[#allocation5 + $0x34] sm:$0xf]
    %v655 = vld [vmem:[#allocation5 + $0x38] sm:$0xf]
    %v656 = vld [vmem:[#allocation5 + $0x3c] sm:$0xf]
    %v657 = vld [vmem:[#allocation5 + $0x40] sm:$0xf]
    %v658 = vld [vmem:[#allocation5 + $0x44] sm:$0xf]
    %v659 = vld [vmem:[#allocation5 + $0x48] sm:$0xf]
    %v660 = vld [vmem:[#allocation5 + $0x4c] sm:$0xf]
    %v661 = vld [vmem:[#allocation5 + $0x50] sm:$0xf]
    %v662 = vld [vmem:[#allocation5 + $0x54] sm:$0xf]
    %v663 = vld [vmem:[#allocation5 + $0x58] sm:$0xf]
    %v664 = vld [vmem:[#allocation5 + $0x5c] sm:$0xf]
    %v665 = vld [vmem:[#allocation5 + $0x60] sm:$0xf]
    %v666 = vld [vmem:[#allocation5 + $0x64] sm:$0xf]
    %v667 = vld [vmem:[#allocation5 + $0x68] sm:$0xf]
    %v668 = vld [vmem:[#allocation5 + $0x6c] sm:$0xf]
    %v669 = vld [vmem:[#allocation5 + $0x70] sm:$0xf]
    %v670 = vld [vmem:[#allocation5 + $0x74] sm:$0xf]
    %v671 = vld [vmem:[#allocation5 + $0x78] sm:$0xf]
    %v672 = vld [vmem:[#allocation5 + $0x7c] sm:$0xf]
    %v673 = vld [vmem:[#allocation5 + $0x80] sm:$0xf]
    %v674 = vld [vmem:[#allocation5 + $0x84] sm:$0xf]
    %v675 = vld [vmem:[#allocation5 + $0x88] sm:$0xf]
    %v676 = vld [vmem:[#allocation5 + $0x8c] sm:$0xf]
    %v677 = vld [vmem:[#allocation5 + $0x90] sm:$0xf]
    %v678 = vld [vmem:[#allocation5 + $0x94] sm:$0xf]
    %v679 = vld [vmem:[#allocation5 + $0x98] sm:$0xf]
    %v680 = vld [vmem:[#allocation5 + $0x9c] sm:$0xf]
    %v681 = vld [vmem:[#allocation5 + $0xa0] sm:$0xf]
    %v682 = vld [vmem:[#allocation5 + $0xa4] sm:$0xf]
    %v683 = vld [vmem:[#allocation5 + $0xa8] sm:$0xf]
    %v684 = vld [vmem:[#allocation5 + $0xac] sm:$0xf]
    %v685 = vld [vmem:[#allocation5 + $0xb0] sm:$0xf]
    %v686 = vld [vmem:[#allocation5 + $0xb4] sm:$0xf]
    %v687 = vld [vmem:[#allocation5 + $0xb8] sm:$0xf]
    %v688 = vld [vmem:[#allocation5 + $0xbc] sm:$0xf]
    %v689 = vld [vmem:[#allocation5 + $0xc0] sm:$0xf]
    %v690 = vld [vmem:[#allocation5 + $0xc4] sm:$0xf]
    %v691 = vld [vmem:[#allocation5 + $0xc8] sm:$0xf]
    %v692 = vld [vmem:[#allocation5 + $0xcc] sm:$0xf]
    %v693 = vld [vmem:[#allocation5 + $0xd0] sm:$0xf]
    %v694 = vld [vmem:[#allocation5 + $0xd4] sm:$0xf]
    %v695 = vld [vmem:[#allocation5 + $0xd8] sm:$0xf]
    %v696 = vld [vmem:[#allocation5 + $0xdc] sm:$0xf]
    %v697 = vld [vmem:[#allocation5 + $0xe0] sm:$0xf]
    %v698 = vld [vmem:[#allocation5 + $0xe4] sm:$0xf]
    %v699 = vld [vmem:[#allocation5 + $0xe8] sm:$0xf]
    %v700 = vld [vmem:[#allocation5 + $0xec] sm:$0xf]
    %v701 = vld [vmem:[#allocation5 + $0xf0] sm:$0xf]
    %v702 = vld [vmem:[#allocation5 + $0xf4] sm:$0xf]
    %v703 = vld [vmem:[#allocation5 + $0xf8] sm:$0xf]
    %v704 = vld [vmem:[#allocation5 + $0xfc] sm:$0xf]
    %v705 = vld [vmem:[%s6] sm:$0x1]
    %v707 = vlaneseq
    %v708 = vshrl.u32 %v707, 7
    %v709 = vsub.s32 0, %v708
    %v710 = vrot.slane %v705, %v709
    %v776 = vunpack.c.l.b16 %v641
    %v777 = vunpack.c.l.b16 %v642
    %v778 = vunpack.c.l.b16 %v643
    %v779 = vunpack.c.l.b16 %v644
    %v780 = vunpack.c.l.b16 %v645
    %v781 = vunpack.c.l.b16 %v646
    %v782 = vunpack.c.l.b16 %v647
    %v783 = vunpack.c.l.b16 %v648
    %v784 = vunpack.c.l.b16 %v649
    %v785 = vunpack.c.l.b16 %v650
    %v786 = vunpack.c.l.b16 %v651
    %v787 = vunpack.c.l.b16 %v652
    %v788 = vunpack.c.l.b16 %v653
    %v789 = vunpack.c.l.b16 %v654
    %v790 = vunpack.c.l.b16 %v655
    %v791 = vunpack.c.l.b16 %v656
    %v792 = vunpack.c.l.b16 %v657
    %v793 = vunpack.c.l.b16 %v658
    %v794 = vunpack.c.l.b16 %v659
    %v795 = vunpack.c.l.b16 %v660
    %v796 = vunpack.c.l.b16 %v661
    %v797 = vunpack.c.l.b16 %v662
    %v798 = vunpack.c.l.b16 %v663
    %v799 = vunpack.c.l.b16 %v664
    %v800 = vunpack.c.l.b16 %v665
    %v801 = vunpack.c.l.b16 %v666
    %v802 = vunpack.c.l.b16 %v667
    %v803 = vunpack.c.l.b16 %v668
    %v804 = vunpack.c.l.b16 %v669
    %v805 = vunpack.c.l.b16 %v670
    %v806 = vunpack.c.l.b16 %v671
    %v807 = vunpack.c.l.b16 %v672
    %v808 = vunpack.c.l.b16 %v673
    %v809 = vunpack.c.l.b16 %v674
    %v810 = vunpack.c.l.b16 %v675
    %v811 = vunpack.c.l.b16 %v676
    %v812 = vunpack.c.l.b16 %v677
    %v813 = vunpack.c.l.b16 %v678
    %v814 = vunpack.c.l.b16 %v679
    %v815 = vunpack.c.l.b16 %v680
    %v816 = vunpack.c.l.b16 %v681
    %v817 = vunpack.c.l.b16 %v682
    %v818 = vunpack.c.l.b16 %v683
    %v819 = vunpack.c.l.b16 %v684
    %v820 = vunpack.c.l.b16 %v685
    %v821 = vunpack.c.l.b16 %v686
    %v822 = vunpack.c.l.b16 %v687
    %v823 = vunpack.c.l.b16 %v688
    %v824 = vunpack.c.l.b16 %v689
    %v825 = vunpack.c.l.b16 %v690
    %v826 = vunpack.c.l.b16 %v691
    %v827 = vunpack.c.l.b16 %v692
    %v828 = vunpack.c.l.b16 %v693
    %v829 = vunpack.c.l.b16 %v694
    %v830 = vunpack.c.l.b16 %v695
    %v831 = vunpack.c.l.b16 %v696
    %v832 = vunpack.c.l.b16 %v697
    %v833 = vunpack.c.l.b16 %v698
    %v834 = vunpack.c.l.b16 %v699
    %v835 = vunpack.c.l.b16 %v700
    %v836 = vunpack.c.l.b16 %v701
    %v837 = vunpack.c.l.b16 %v702
    %v838 = vunpack.c.l.b16 %v703
    %v839 = vunpack.c.l.b16 %v704
    %v840 = vpack.c.b16 %v777, %v776
    %v841 = vpack.c.b16 %v779, %v778
    %v842 = vpack.c.b16 %v781, %v780
    %v843 = vpack.c.b16 %v783, %v782
    %v844 = vpack.c.b16 %v785, %v784
    %v845 = vpack.c.b16 %v787, %v786
    %v846 = vpack.c.b16 %v789, %v788
    %v847 = vpack.c.b16 %v791, %v790
    %v848 = vpack.c.b16 %v793, %v792
    %v849 = vpack.c.b16 %v795, %v794
    %v850 = vpack.c.b16 %v797, %v796
    %v851 = vpack.c.b16 %v799, %v798
    %v852 = vpack.c.b16 %v801, %v800
    %v853 = vpack.c.b16 %v803, %v802
    %v854 = vpack.c.b16 %v805, %v804
    %v855 = vpack.c.b16 %v807, %v806
    %v856 = vpack.c.b16 %v809, %v808
    %v857 = vpack.c.b16 %v811, %v810
    %v858 = vpack.c.b16 %v813, %v812
    %v859 = vpack.c.b16 %v815, %v814
    %v860 = vpack.c.b16 %v817, %v816
    %v861 = vpack.c.b16 %v819, %v818
    %v862 = vpack.c.b16 %v821, %v820
    %v863 = vpack.c.b16 %v823, %v822
    %v864 = vpack.c.b16 %v825, %v824
    %v865 = vpack.c.b16 %v827, %v826
    %v866 = vpack.c.b16 %v829, %v828
    %v867 = vpack.c.b16 %v831, %v830
    %v868 = vpack.c.b16 %v833, %v832
    %v869 = vpack.c.b16 %v835, %v834
    %v870 = vpack.c.b16 %v837, %v836
    %v871 = vpack.c.b16 %v839, %v838
    %904 = vmatprep.subr.bf16.mxu0 0
    %905 = vmatpush1.bf16.msra.mxu0 %v847
    %906 = vmatprep.subr.bf16.mxu0 0
    %907 = vmatpush1.bf16.msra.mxu0 %v846
    %908 = vmatprep.subr.bf16.mxu0 0
    %909 = vmatpush1.bf16.msra.mxu0 %v845
    %910 = vmatprep.subr.bf16.mxu0 0
    %911 = vmatpush1.bf16.msra.mxu0 %v844
    %912 = vmatprep.subr.bf16.mxu0 0
    %913 = vmatpush1.bf16.msra.mxu0 %v843
    %914 = vmatprep.subr.bf16.mxu0 0
    %915 = vmatpush1.bf16.msra.mxu0 %v842
    %916 = vmatprep.subr.bf16.mxu0 0
    %917 = vmatpush1.bf16.msra.mxu0 %v841
    %918 = vmatprep.subr.bf16.mxu0 0
    %919 = vmatpush1.bf16.msra.mxu0 %v840
    %920 = vmatprep.subr.bf16.mxu0 0
    %921 = vmatpush2.bf16.msra.mxu0 %v855
    %922 = vmatprep.subr.bf16.mxu0 0
    %923 = vmatpush2.bf16.msra.mxu0 %v854
    %924 = vmatprep.subr.bf16.mxu0 0
    %925 = vmatpush2.bf16.msra.mxu0 %v853
    %926 = vmatprep.subr.bf16.mxu0 0
    %927 = vmatpush2.bf16.msra.mxu0 %v852
    %928 = vmatprep.subr.bf16.mxu0 0
    %929 = vmatpush2.bf16.msra.mxu0 %v851
    %930 = vmatprep.subr.bf16.mxu0 0
    %931 = vmatpush2.bf16.msra.mxu0 %v850
    %932 = vmatprep.subr.bf16.mxu0 0
    %933 = vmatpush2.bf16.msra.mxu0 %v849
    %934 = vmatprep.subr.bf16.mxu0 0
    %935 = vmatpush2.bf16.msra.mxu0 %v848
    %936 = vmatprep.mubr.bf16.mxu0 %v638
    %937 = vmatmul.mubr.bf16.gmra.mxu0 %v637
    %v938 = vpop.f32.mrf.mxu0
    %v939 = vadd.f32 %v710, %v938
    %v940 = vpop.f32.mrf.mxu0
    %v941 = vpop.f32.mrf.mxu0
    %v942 = vadd.f32 %v710, %v941
    %v943 = vpop.f32.mrf.mxu0
    %944 = vdwg.mxu0
    %945 = vmatprep.subr.bf16.mxu0 0
    %946 = vmatpush1.bf16.msra.mxu0 %v863
    %947 = vmatprep.subr.bf16.mxu0 0
    %948 = vmatpush1.bf16.msra.mxu0 %v862
    %949 = vmatprep.subr.bf16.mxu0 0
    %950 = vmatpush1.bf16.msra.mxu0 %v861
    %951 = vmatprep.subr.bf16.mxu0 0
    %952 = vmatpush1.bf16.msra.mxu0 %v860
    %953 = vmatprep.subr.bf16.mxu0 0
    %954 = vmatpush1.bf16.msra.mxu0 %v859
    %955 = vmatprep.subr.bf16.mxu0 0
    %956 = vmatpush1.bf16.msra.mxu0 %v858
    %957 = vmatprep.subr.bf16.mxu0 0
    %958 = vmatpush1.bf16.msra.mxu0 %v857
    %959 = vmatprep.subr.bf16.mxu0 0
    %960 = vmatpush1.bf16.msra.mxu0 %v856
    %961 = vmatprep.subr.bf16.mxu0 0
    %962 = vmatpush2.bf16.msra.mxu0 %v871
    %963 = vmatprep.subr.bf16.mxu0 0
    %964 = vmatpush2.bf16.msra.mxu0 %v870
    %965 = vmatprep.subr.bf16.mxu0 0
    %966 = vmatpush2.bf16.msra.mxu0 %v869
    %967 = vmatprep.subr.bf16.mxu0 0
    %968 = vmatpush2.bf16.msra.mxu0 %v868
    %969 = vmatprep.subr.bf16.mxu0 0
    %970 = vmatpush2.bf16.msra.mxu0 %v867
    %971 = vmatprep.subr.bf16.mxu0 0
    %972 = vmatpush2.bf16.msra.mxu0 %v866
    %973 = vmatprep.subr.bf16.mxu0 0
    %974 = vmatpush2.bf16.msra.mxu0 %v865
    %975 = vmatprep.subr.bf16.mxu0 0
    %976 = vmatpush2.bf16.msra.mxu0 %v864
    %977 = vmatprep.mubr.bf16.mxu0 %v640
    %978 = vmatmul.mubr.bf16.gmra.mxu0 %v639
    %v979 = vpop.f32.mrf.mxu0
    %v980 = vadd.f32 %v939, %v979
    %v981 = vpop.f32.mrf.mxu0
    %v982 = vpop.f32.mrf.mxu0
    %v983 = vadd.f32 %v942, %v982
    %v984 = vpop.f32.mrf.mxu0
    %985 = vdwg.mxu0
    %v986 = vpack.c.bf16 %v983, %v980
    %v988 = vunpack.c.l.b16 %v986
    %v989 = vunpack.c.h.b16 %v986
    %v990 = vpack.c.b16 %v988, %v988
    %v991 = vpack.c.b16 %v989, %v989
    %994 = vst [vmem:[#allocation7] sm:$0xf] %v990
    %995 = vst [vmem:[#allocation7 + $0x4] sm:$0xf] %v991
    // Predicated region
    $region38: #{tpu_custom_call.1} parent=1 // pred_check
      _
    $region39: #{tpu_custom_call.1} parent=1 // pred_check_branch
      %997 = sbr.rel (0) target = $region41
    $region40: #{tpu_custom_call.1} parent=1 // pred_region
      %s999 = ssub.s32 128, 128
      %1000 = vsyncadd [#allocation4], %s999
      %s1001 = sshll.u32 [#allocation7], 4
      %s1002 = int_to_ptr.vmem [resolvable:$true] %s1001
      %1007 = dma.vmem_to_hbm [thread:$0]  %s1002, 128, %s7, [#allocation4], 64, 64, 4
    $region41: #{tpu_custom_call.1} parent=1 // pred_fallthru
      _
    // Predicated region
    $region42: #{tpu_custom_call.1} parent=1 // pred_check
      _
    $region43: #{tpu_custom_call.1} parent=1 // pred_check_branch
      %1009 = sbr.rel (0) target = $region45
    $region44: #{tpu_custom_call.1} parent=1 // pred_region
      %1010 = dma.done [#allocation4], 128
    $region45: #{tpu_custom_call.1} parent=1 // pred_fallthru
      _
    %1011 = vsyncpa [#allocation3], 1
    %1012 = vsyncpa [#allocation6], 1
    %1013 = vsyncpa [#allocation4], 1

</llo_original>
